<compile_context>
chip_gen: v7x
topology: tpu7x:2x2x1
jax: 0.10.0
libtpu: 0.0.40
codegen_flags: <defaults>
</compile_context>

<pallas_src>
import functools

import jax
import jax.numpy as jnp
from jax.experimental import pallas as pl
from jax.experimental.pallas import tpu as pltpu


def next_multiple_of_n(v, *, n):
    return next((x for x in range(n, int(v) + 1 + n, n) if x >= v))


def _round_up(v, n):
    return ((v + n - 1) // n) * n


def _pick_hidden_tile(H, max_th):
    """Largest multiple of 128 that divides H and is <= max_th."""
    if H % 128 != 0:
        return H                     # fallback: whole-H blocks (still correct)
    th = max(128, (min(max_th, H) // 128) * 128)
    while H % th != 0:
        th -= 128
    return th


def mlp_kernel(x_ref, wfc_ref, wproj_ref, o_ref, acc_ref):
    # x_ref:     (TM, D)   activation tile (same block across all H-steps)
    # wfc_ref:   (TH, D)   c_fc weight tile, torch (out, in) layout
    # wproj_ref: (D, TH)   c_proj weight tile, torch (out, in) layout
    # o_ref:     (TM, D)   output tile (resident across the H axis)
    # acc_ref:   (TM, D)   f32 accumulator scratch
    h_step = pl.program_id(1)

    @pl.when(h_step == 0)
    def _():
        acc_ref[...] = jnp.zeros_like(acc_ref)

    x = x_ref[...]
    # h = x @ wfc_tile^T  (contract D on both operands), f32 MXU accumulation.
    h = jax.lax.dot_general(
        x, wfc_ref[...],
        dimension_numbers=(((1,), (1,)), ((), ())),
        preferred_element_type=jnp.float32)
    h = jnp.maximum(h, 0.0)
    h = h * h                                    # relu(.)^2 epilogue in f32

    # acc += h @ wproj_tile^T  (contract TH on both operands).
    acc_ref[...] += jax.lax.dot_general(
        h.astype(x.dtype), wproj_ref[...],
        dimension_numbers=(((1,), (1,)), ((), ())),
        preferred_element_type=jnp.float32)

    @pl.when(h_step == pl.num_programs(1) - 1)
    def _():
        o_ref[...] = acc_ref[...].astype(o_ref.dtype)


@functools.partial(jax.jit, static_argnames=("tile_m", "tile_h"))
def mlp_forward(x, w_fc, w_proj, *, tile_m=256, tile_h=512):
    """x: (B, T, D); w_fc: (H, D) torch layout; w_proj: (D, H) torch layout."""
    B, T, D = x.shape
    H, D_in = w_fc.shape
    assert D_in == D and w_proj.shape == (D, H)

    # CastedLinear semantics: weights are cast to the activation dtype
    # (bf16 activations -> bf16 weight tiles -> bf16 MXU matmuls, f32 accum).
    w_fc = w_fc.astype(x.dtype)
    w_proj = w_proj.astype(x.dtype)

    M = B * T
    tm = min(tile_m, _round_up(M, 8))
    tm = max(8, tm - tm % 8)
    th = _pick_hidden_tile(H, tile_h)
    m_pad = pl.cdiv(M, tm) * tm

    x2d = x.reshape(M, D)
    if m_pad != M:
        x2d = jnp.pad(x2d, ((0, m_pad - M), (0, 0)))

    # VMEM budget: double-buffered x / weight / out tiles + f32 accumulator.
    itm = x.dtype.itemsize
    est = 2 * (tm * D + th * D + D * th + tm * D) * itm + tm * D * 4
    vmem_limit = int(min(100 << 20, max(32 << 20, 2 * est)))

    out2d = pl.pallas_call(
        mlp_kernel,
        out_shape=jax.ShapeDtypeStruct((m_pad, D), x.dtype),
        grid_spec=pltpu.PrefetchScalarGridSpec(
            num_scalar_prefetch=0,
            grid=(m_pad // tm, H // th),          # (row tiles, hidden tiles)
            in_specs=[
                pl.BlockSpec((tm, D), lambda i, h: (i, 0)),   # activations
                pl.BlockSpec((th, D), lambda i, h: (h, 0)),   # c_fc  (H, D)
                pl.BlockSpec((D, th), lambda i, h: (0, h)),   # c_proj (D, H)
            ],
            out_specs=pl.BlockSpec((tm, D), lambda i, h: (i, 0)),
            scratch_shapes=[pltpu.VMEM((tm, D), jnp.float32)],
        ),
        compiler_params=pltpu.CompilerParams(
            dimension_semantics=("parallel", "arbitrary"),
            vmem_limit_bytes=vmem_limit,
        ),
    )(x2d, w_fc, w_proj)

    if m_pad != M:
        out2d = out2d[:M]
    return out2d.reshape(B, T, D)


def init_mlp_params(key, dim, expansion_factor=4.0, dtype=jnp.float32):
    """Matches CastedLinear.reset_parameters / MLP.__init__ (c_proj zeroed)."""
    hdim = next_multiple_of_n(int(expansion_factor * dim), n=128)
    std = 0.5 * dim ** (-0.5)
    bound = (3.0 ** 0.5) * std
    k_fc, _ = jax.random.split(key)
    w_fc = jax.random.uniform(k_fc, (hdim, dim), dtype=dtype,
                              minval=-bound, maxval=bound)   # torch (out, in)
    w_proj = jnp.zeros((dim, hdim), dtype=dtype)             # zero-initialized
    return w_fc, w_proj


if __name__ == "__main__":
    key = jax.random.PRNGKey(0)
    B, T, D = 2, 8, 64          # hdim = next_multiple_of_n(256, 128) = 256
    k_x, k_w, k_p = jax.random.split(key, 3)

    x = jax.random.normal(k_x, (B, T, D), dtype=jnp.float32)
    w_fc, w_proj_zero = init_mlp_params(k_w, D)
    H = w_fc.shape[0]

    def ref_fn(x, w_fc, w_proj):
        h = jnp.maximum(x.reshape(-1, D) @ w_fc.T, 0.0) ** 2
        return (h @ w_proj.T).reshape(x.shape)

    # 1) Module-faithful init: c_proj is zero-initialized -> output is zero.
    y0 = jax.block_until_ready(mlp_forward(x, w_fc, w_proj_zero))
    assert y0.shape == (B, T, D)
    assert jnp.allclose(y0, 0.0)

    # 2) Random c_proj to exercise both matmuls, f32 check.
    bound = (3.0 ** 0.5) * 0.5 * H ** (-0.5)
    w_proj = jax.random.uniform(k_p, (D, H), dtype=jnp.float32,
                                minval=-bound, maxval=bound)
    y = jax.block_until_ready(mlp_forward(x, w_fc, w_proj))
    y_ref = ref_fn(x, w_fc, w_proj)
    assert jnp.allclose(y, y_ref, atol=1e-4, rtol=1e-4)

    # 3) bf16 activations (bf16 MXU matmuls, f32 accumulation), loose check.
    y_bf16 = jax.block_until_ready(
        mlp_forward(x.astype(jnp.bfloat16), w_fc, w_proj))
    assert y_bf16.dtype == jnp.bfloat16
    assert jnp.allclose(y_bf16.astype(jnp.float32), y_ref, atol=1e-1, rtol=1e-1)

    print("KERNEL_OK")
</pallas_src>

<mosaic_0001>
module attributes {stable_mosaic.version = 11 : i64} {
  func.func @mlp_kernel(%arg0: i32, %arg1: i32, %arg2: memref<16x64xf32, #tpu.memory_space<vmem>>, %arg3: memref<256x64xf32, #tpu.memory_space<vmem>>, %arg4: memref<64x256xf32, #tpu.memory_space<vmem>>, %arg5: memref<16x64xf32, #tpu.memory_space<vmem>>, %arg6: memref<16x64xf32, #tpu.memory_space<vmem>>) attributes {dimension_semantics = [#tpu.dimension_semantics<parallel>, #tpu.dimension_semantics<arbitrary>], iteration_bounds = array<i64: 1, 1>, scalar_prefetch = 0 : i64, scratch_operands = 1 : i64, tpu.core_type = #tpu.core_type<tc>, window_params = [{transform_indices = @transform_0, window_bounds = array<i64: 16, 64>}, {transform_indices = @transform_1, window_bounds = array<i64: 256, 64>}, {transform_indices = @transform_2, window_bounds = array<i64: 64, 256>}, {transform_indices = @transform_3, window_bounds = array<i64: 16, 64>}]} {
    %c0_i32 = arith.constant 0 : i32
    %0 = arith.cmpi eq, %arg1, %c0_i32 : i32
    %1 = arith.extui %0 : i1 to i32
    %c0_i32_0 = arith.constant 0 : i32
    %2 = arith.cmpi ne, %1, %c0_i32_0 : i32
    scf.if %2 {
      %cst_14 = arith.constant 0.000000e+00 : f32
      %17 = vector.broadcast %cst_14 : f32 to vector<16x64xf32>
      %c0_15 = arith.constant 0 : index
      %c0_16 = arith.constant 0 : index
      %18 = vector.load %arg6[%c0_15, %c0_16] : memref<16x64xf32, #tpu.memory_space<vmem>>, vector<16x64xf32>
      tpu.vector_store %arg6[%c0_15, %c0_16], %17 {strides = array<i32>} : memref<16x64xf32, #tpu.memory_space<vmem>>, vector<16x64xf32>,
    } else {
    }
    %c0 = arith.constant 0 : index
    %c0_1 = arith.constant 0 : index
    %3 = vector.load %arg2[%c0, %c0_1] : memref<16x64xf32, #tpu.memory_space<vmem>>, vector<16x64xf32>
    %c0_2 = arith.constant 0 : index
    %c0_3 = arith.constant 0 : index
    %4 = vector.load %arg3[%c0_2, %c0_3] : memref<256x64xf32, #tpu.memory_space<vmem>>, vector<256x64xf32>
    %cst = arith.constant dense<0.000000e+00> : vector<16x256xf32>
    %5 = tpu.matmul %3, %4, %cst {dimension_numbers = #tpu.dot_dimension_numbers<[1], [1], [0], [0], [0, 0, 1, 0], [], []>} : vector<16x64xf32>, vector<256x64xf32>, vector<16x256xf32> -> vector<16x256xf32>
    %cst_4 = arith.constant 0.000000e+00 : f32
    %6 = vector.broadcast %cst_4 : f32 to vector<16x256xf32>
    %7 = arith.maximumf %5, %6 : vector<16x256xf32>
    %8 = arith.mulf %7, %7 : vector<16x256xf32>
    %c0_5 = arith.constant 0 : index
    %c0_6 = arith.constant 0 : index
    %9 = vector.load %arg6[%c0_5, %c0_6] : memref<16x64xf32, #tpu.memory_space<vmem>>, vector<16x64xf32>
    %c0_7 = arith.constant 0 : index
    %c0_8 = arith.constant 0 : index
    %10 = vector.load %arg4[%c0_7, %c0_8] : memref<64x256xf32, #tpu.memory_space<vmem>>, vector<64x256xf32>
    %cst_9 = arith.constant dense<0.000000e+00> : vector<16x64xf32>
    %11 = tpu.matmul %8, %10, %cst_9 {dimension_numbers = #tpu.dot_dimension_numbers<[1], [1], [0], [0], [0, 0, 1, 0], [], []>} : vector<16x256xf32>, vector<64x256xf32>, vector<16x64xf32> -> vector<16x64xf32>
    %12 = arith.addf %9, %11 : vector<16x64xf32>
    %c0_10 = arith.constant 0 : index
    %c0_11 = arith.constant 0 : index
    %13 = vector.load %arg6[%c0_10, %c0_11] : memref<16x64xf32, #tpu.memory_space<vmem>>, vector<16x64xf32>
    tpu.vector_store %arg6[%c0_10, %c0_11], %12 {strides = array<i32>} : memref<16x64xf32, #tpu.memory_space<vmem>>, vector<16x64xf32>,
    %c0_i32_12 = arith.constant 0 : i32
    %14 = arith.cmpi eq, %arg1, %c0_i32_12 : i32
    %15 = arith.extui %14 : i1 to i32
    %c0_i32_13 = arith.constant 0 : i32
    %16 = arith.cmpi ne, %15, %c0_i32_13 : i32
    scf.if %16 {
      %c0_14 = arith.constant 0 : index
      %c0_15 = arith.constant 0 : index
      %17 = vector.load %arg6[%c0_14, %c0_15] : memref<16x64xf32, #tpu.memory_space<vmem>>, vector<16x64xf32>
      %c0_16 = arith.constant 0 : index
      %c0_17 = arith.constant 0 : index
      %18 = vector.load %arg5[%c0_16, %c0_17] : memref<16x64xf32, #tpu.memory_space<vmem>>, vector<16x64xf32>
      tpu.vector_store %arg5[%c0_16, %c0_17], %17 {strides = array<i32>} : memref<16x64xf32, #tpu.memory_space<vmem>>, vector<16x64xf32>,
    } else {
    }
    return
  }
  func.func @transform_0(%arg0: i32, %arg1: i32) -> (i32, i32) {
    %c0_i32 = arith.constant 0 : i32
    %c0_i32_0 = arith.constant 0 : i32
    return %arg0, %c0_i32 : i32, i32
  }
  func.func @transform_1(%arg0: i32, %arg1: i32) -> (i32, i32) {
    %c0_i32 = arith.constant 0 : i32
    %c0_i32_0 = arith.constant 0 : i32
    return %arg1, %c0_i32 : i32, i32
  }
  func.func @transform_2(%arg0: i32, %arg1: i32) -> (i32, i32) {
    %c0_i32 = arith.constant 0 : i32
    %c0_i32_0 = arith.constant 0 : i32
    return %c0_i32, %arg1 : i32, i32
  }
  func.func @transform_3(%arg0: i32, %arg1: i32) -> (i32, i32) {
    %c0_i32 = arith.constant 0 : i32
    %c0_i32_0 = arith.constant 0 : i32
    return %arg0, %c0_i32 : i32, i32
  }
}

</mosaic_0001>

<llo_original>
// kernel: mlp_forward.1
$region0: #{mlp_forward.1}
  #allocation0 [shape = 'u32[]', space=smem, size = 0x4, offset = 0x4, fixed_abs, tag = 'smem constant byte address 0x4 - core index']
  #allocation1 [shape = 'u32[144,128]{1,0:T(1,128)}', space=vmem, size = 0x12000, scoped, tag = 'internal scratch']
  #allocation2 [shape = 'f32[16,64]{1,0:T(8,128)}', space=vmem, size = 0x2000, scoped, tag = 'scratch operand']
  %s0 = inlined_call_operand.vmem [shape: f32[16,64], index: 0, kind: input, shape index: {}]
  %s1 = inlined_call_operand.vmem [shape: f32[256,64], index: 1, kind: input, shape index: {}]
  %s2 = inlined_call_operand.vmem [shape: f32[64,256], index: 2, kind: input, shape index: {}]
  %s3 = inlined_call_operand.hbm [shape: f32[16,64], index: 3, kind: output, shape index: {}]
  %s4 = sld [smem:[#allocation0]]
  $region30: #{mlp_forward.1} parent=0
    _
  %s6 = ssub.s32 1, %s4
  %s7 = scalar_select 0, %s6, %s4
  $region1: #{mlp_forward.1} parent=0
    #allocation3 [shape = 'u8[8192]{0}', space=vmem, size = 0x2000, scoped, tag = 'output window, operand 0, single buffered']
    #allocation4 [shape = 's32[1]{0}', space=sflag, size = 0x4, scoped, tag = 'scoped memory for mlp_forward.1']
    %8 = vsyncpa [#allocation4], 0
    // Predicated region
    $region2: #{mlp_forward.1} parent=1 // pred_check
      _
    $region3: #{mlp_forward.1} parent=1 // pred_check_branch
      %10 = sbr.rel (0) target = $region5
    $region4: #{mlp_forward.1} parent=1 // pred_region
      _
    $region5: #{mlp_forward.1} parent=1 // pred_fallthru
      _
    // Predicated region
    $region6: #{mlp_forward.1} parent=1 // pred_check
      _
    $region7: #{mlp_forward.1} parent=1 // pred_check_branch
      %12 = sbr.rel (0) target = $region9
    $region8: #{mlp_forward.1} parent=1 // pred_region
      _
    $region9: #{mlp_forward.1} parent=1 // pred_fallthru
      _
    // Predicated region
    $region10: #{mlp_forward.1} parent=1 // pred_check
      _
    $region11: #{mlp_forward.1} parent=1 // pred_check_branch
      %14 = sbr.rel (0) target = $region13
    $region12: #{mlp_forward.1} parent=1 // pred_region
      _
    $region13: #{mlp_forward.1} parent=1 // pred_fallthru
      _
    %p15 = scmp.eq.s32.totalorder 0, 0
    // Predicated region
    $region14: #{mlp_forward.1} parent=1 // pred_check
      %p16 = pneg %p15
    $region15: #{mlp_forward.1} parent=1 // pred_check_branch
      %18 = sbr.rel (%p16) target = $region17
    $region16: #{mlp_forward.1} parent=1 // pred_region
      %vm19 = vcmask 523264
      %20 = vst.msk [vmem:[#allocation2] sm:$0xff] %vm19, 0.0
      %21 = vst.msk [vmem:[#allocation2 + $0x8] sm:$0xff] %vm19, 0.0
    $region17: #{mlp_forward.1} parent=1 // pred_fallthru
      _
    %v22 = vld [vmem:[%s0] sm:$0xff]
    %v23 = vld [vmem:[%s0 + $0x8] sm:$0xff]
    %v24 = vld [vmem:[%s1] sm:$0xff]
    %v25 = vld [vmem:[%s1 + $0x8] sm:$0xff]
    %v26 = vld [vmem:[%s1 + $0x10] sm:$0xff]
    %v27 = vld [vmem:[%s1 + $0x18] sm:$0xff]
    %v28 = vld [vmem:[%s1 + $0x20] sm:$0xff]
    %v29 = vld [vmem:[%s1 + $0x28] sm:$0xff]
    %v30 = vld [vmem:[%s1 + $0x30] sm:$0xff]
    %v31 = vld [vmem:[%s1 + $0x38] sm:$0xff]
    %v32 = vld [vmem:[%s1 + $0x40] sm:$0xff]
    %v33 = vld [vmem:[%s1 + $0x48] sm:$0xff]
    %v34 = vld [vmem:[%s1 + $0x50] sm:$0xff]
    %v35 = vld [vmem:[%s1 + $0x58] sm:$0xff]
    %v36 = vld [vmem:[%s1 + $0x60] sm:$0xff]
    %v37 = vld [vmem:[%s1 + $0x68] sm:$0xff]
    %v38 = vld [vmem:[%s1 + $0x70] sm:$0xff]
    %v39 = vld [vmem:[%s1 + $0x78] sm:$0xff]
    %v40 = vld [vmem:[%s1 + $0x80] sm:$0xff]
    %v41 = vld [vmem:[%s1 + $0x88] sm:$0xff]
    %v42 = vld [vmem:[%s1 + $0x90] sm:$0xff]
    %v43 = vld [vmem:[%s1 + $0x98] sm:$0xff]
    %v44 = vld [vmem:[%s1 + $0xa0] sm:$0xff]
    %v45 = vld [vmem:[%s1 + $0xa8] sm:$0xff]
    %v46 = vld [vmem:[%s1 + $0xb0] sm:$0xff]
    %v47 = vld [vmem:[%s1 + $0xb8] sm:$0xff]
    %v48 = vld [vmem:[%s1 + $0xc0] sm:$0xff]
    %v49 = vld [vmem:[%s1 + $0xc8] sm:$0xff]
    %v50 = vld [vmem:[%s1 + $0xd0] sm:$0xff]
    %v51 = vld [vmem:[%s1 + $0xd8] sm:$0xff]
    %v52 = vld [vmem:[%s1 + $0xe0] sm:$0xff]
    %v53 = vld [vmem:[%s1 + $0xe8] sm:$0xff]
    %v54 = vld [vmem:[%s1 + $0xf0] sm:$0xff]
    %v55 = vld [vmem:[%s1 + $0xf8] sm:$0xff]
    %vm56 = vcmask 523264
    %v58 = vsel %vm56, %v22, 0
    %v61 = vsel %vm56, %v23, 0
    %v64 = vsel %vm56, %v24, 0
    %v67 = vsel %vm56, %v25, 0
    %v70 = vsel %vm56, %v26, 0
    %v73 = vsel %vm56, %v27, 0
    %v76 = vsel %vm56, %v28, 0
    %v79 = vsel %vm56, %v29, 0
    %v82 = vsel %vm56, %v30, 0
    %v85 = vsel %vm56, %v31, 0
    %v88 = vsel %vm56, %v32, 0
    %v91 = vsel %vm56, %v33, 0
    %v94 = vsel %vm56, %v34, 0
    %v97 = vsel %vm56, %v35, 0
    %v100 = vsel %vm56, %v36, 0
    %v103 = vsel %vm56, %v37, 0
    %v106 = vsel %vm56, %v38, 0
    %v109 = vsel %vm56, %v39, 0
    %v112 = vsel %vm56, %v40, 0
    %v115 = vsel %vm56, %v41, 0
    %v118 = vsel %vm56, %v42, 0
    %v121 = vsel %vm56, %v43, 0
    %v124 = vsel %vm56, %v44, 0
    %v127 = vsel %vm56, %v45, 0
    %v130 = vsel %vm56, %v46, 0
    %v133 = vsel %vm56, %v47, 0
    %v136 = vsel %vm56, %v48, 0
    %v139 = vsel %vm56, %v49, 0
    %v142 = vsel %vm56, %v50, 0
    %v145 = vsel %vm56, %v51, 0
    %v148 = vsel %vm56, %v52, 0
    %v151 = vsel %vm56, %v53, 0
    %v154 = vsel %vm56, %v54, 0
    %v157 = vsel %vm56, %v55, 0
    %159 = vmatprep.subr.mxu0 0.0
    %160 = vmatpush1.xpose.msra.mxu0 %v64
    %161 = vmatprep.subr.mxu0 0.0
    %162 = vmatpush1.xpose.msra.mxu0 %v67
    %163 = vmatprep.subr.mxu0 0.0
    %164 = vmatpush1.xpose.msra.mxu0 %v70
    %165 = vmatprep.subr.mxu0 0.0
    %166 = vmatpush1.xpose.msra.mxu0 %v73
    %167 = vmatprep.subr.mxu0 0.0
    %168 = vmatpush1.xpose.msra.mxu0 %v76
    %169 = vmatprep.subr.mxu0 0.0
    %170 = vmatpush1.xpose.msra.mxu0 %v79
    %171 = vmatprep.subr.mxu0 0.0
    %172 = vmatpush1.xpose.msra.mxu0 %v82
    %173 = vmatprep.subr.mxu0 0.0
    %174 = vmatpush1.xpose.msra.mxu0 %v85
    %175 = vmatprep.subr.mxu0 0.0
    %176 = vmatpush1.xpose.msra.mxu0 %v88
    %177 = vmatprep.subr.mxu0 0.0
    %178 = vmatpush1.xpose.msra.mxu0 %v91
    %179 = vmatprep.subr.mxu0 0.0
    %180 = vmatpush1.xpose.msra.mxu0 %v94
    %181 = vmatprep.subr.mxu0 0.0
    %182 = vmatpush1.xpose.msra.mxu0 %v97
    %183 = vmatprep.subr.mxu0 0.0
    %184 = vmatpush1.xpose.msra.mxu0 %v100
    %185 = vmatprep.subr.mxu0 0.0
    %186 = vmatpush1.xpose.msra.mxu0 %v103
    %187 = vmatprep.subr.mxu0 0.0
    %188 = vmatpush1.xpose.msra.mxu0 %v106
    %189 = vmatprep.subr.mxu0 0.0
    %190 = vmatpush1.xpose.msra.mxu0 %v109
    %191 = vmatprep.subr.mxu0 0.0
    %192 = vmatpush1.xpose.msra.mxu0 %v112
    %193 = vmatprep.subr.mxu0 0.0
    %194 = vmatpush1.xpose.msra.mxu0 %v115
    %195 = vmatprep.subr.mxu0 0.0
    %196 = vmatpush1.xpose.msra.mxu0 %v118
    %197 = vmatprep.subr.mxu0 0.0
    %198 = vmatpush1.xpose.msra.mxu0 %v121
    %199 = vmatprep.subr.mxu0 0.0
    %200 = vmatpush1.xpose.msra.mxu0 %v124
    %201 = vmatprep.subr.mxu0 0.0
    %202 = vmatpush1.xpose.msra.mxu0 %v127
    %203 = vmatprep.subr.mxu0 0.0
    %204 = vmatpush1.xpose.msra.mxu0 %v130
    %205 = vmatprep.subr.mxu0 0.0
    %206 = vmatpush1.xpose.msra.mxu0 %v133
    %207 = vmatprep.subr.mxu0 0.0
    %208 = vmatpush1.xpose.msra.mxu0 %v136
    %209 = vmatprep.subr.mxu0 0.0
    %210 = vmatpush1.xpose.msra.mxu0 %v139
    %211 = vmatprep.subr.mxu0 0.0
    %212 = vmatpush1.xpose.msra.mxu0 %v142
    %213 = vmatprep.subr.mxu0 0.0
    %214 = vmatpush1.xpose.msra.mxu0 %v145
    %215 = vmatprep.subr.mxu0 0.0
    %216 = vmatpush1.xpose.msra.mxu0 %v148
    %217 = vmatprep.subr.mxu0 0.0
    %218 = vmatpush1.xpose.msra.mxu0 %v151
    %219 = vmatprep.subr.mxu0 0.0
    %220 = vmatpush1.xpose.msra.mxu0 %v154
    %221 = vmatprep.subr.mxu0 0.0
    %222 = vmatpush1.xpose.msra.mxu0 %v157
    %223 = vmatprep.mubr.f32.mxu0 0.0
    %224 = vmatmul.mubr.f32.gmra.mrb[0].mxu0 %v58
    %v225 = vpop.f32.mrb[0].mxu0
    %v226 = vadd.f32 0.0, %v225
    %v227 = vpop.f32.mrb[0].mxu0
    %v228 = vadd.f32 0.0, %v227
    %229 = vmatprep.mubr.f32.mxu0 0.0
    %230 = vmatmul.mubr.f32.gmra.mrb[0].mxu0 %v61
    %v231 = vpop.f32.mrb[0].mxu0
    %v232 = vadd.f32 0.0, %v231
    %v233 = vpop.f32.mrb[0].mxu0
    %v234 = vadd.f32 0.0, %v233
    %235 = vdwg.mxu0
    %v236 = vmax.f32 %v226, 0.0
    %v237 = vmax.f32 %v228, 0.0
    %v238 = vmax.f32 %v232, 0.0
    %v239 = vmax.f32 %v234, 0.0
    %v240 = vmul.f32 %v236, %v236
    %v241 = vmul.f32 %v237, %v237
    %v242 = vmul.f32 %v238, %v238
    %v243 = vmul.f32 %v239, %v239
    %v244 = vld [vmem:[#allocation2] sm:$0xff]
    %v245 = vld [vmem:[#allocation2 + $0x8] sm:$0xff]
    %v246 = vld [vmem:[%s2] sm:$0xff]
    %v247 = vld [vmem:[%s2 + $0x8] sm:$0xff]
    %v248 = vld [vmem:[%s2 + $0x10] sm:$0xff]
    %v249 = vld [vmem:[%s2 + $0x18] sm:$0xff]
    %v250 = vld [vmem:[%s2 + $0x20] sm:$0xff]
    %v251 = vld [vmem:[%s2 + $0x28] sm:$0xff]
    %v252 = vld [vmem:[%s2 + $0x30] sm:$0xff]
    %v253 = vld [vmem:[%s2 + $0x38] sm:$0xff]
    %v254 = vld [vmem:[%s2 + $0x40] sm:$0xff]
    %v255 = vld [vmem:[%s2 + $0x48] sm:$0xff]
    %v256 = vld [vmem:[%s2 + $0x50] sm:$0xff]
    %v257 = vld [vmem:[%s2 + $0x58] sm:$0xff]
    %v258 = vld [vmem:[%s2 + $0x60] sm:$0xff]
    %v259 = vld [vmem:[%s2 + $0x68] sm:$0xff]
    %v260 = vld [vmem:[%s2 + $0x70] sm:$0xff]
    %v261 = vld [vmem:[%s2 + $0x78] sm:$0xff]
    %262 = vmatprep.subr.mxu0 %v247
    %263 = vmatpush1.xpose.msra.mxu0 %v246
    %264 = vmatprep.subr.mxu0 %v249
    %265 = vmatpush1.xpose.msra.mxu0 %v248
    %266 = vmatprep.subr.mxu0 %v251
    %267 = vmatpush1.xpose.msra.mxu0 %v250
    %268 = vmatprep.subr.mxu0 %v253
    %269 = vmatpush1.xpose.msra.mxu0 %v252
    %270 = vmatprep.subr.mxu0 %v255
    %271 = vmatpush1.xpose.msra.mxu0 %v254
    %272 = vmatprep.subr.mxu0 %v257
    %273 = vmatpush1.xpose.msra.mxu0 %v256
    %274 = vmatprep.subr.mxu0 %v259
    %275 = vmatpush1.xpose.msra.mxu0 %v258
    %276 = vmatprep.subr.mxu0 %v261
    %277 = vmatpush1.xpose.msra.mxu0 %v260
    %278 = vmatprep.subr.mxu0 0.0
    %279 = vmatpush1.xpose.msra.mxu0 0.0
    %280 = vmatprep.subr.mxu0 0.0
    %281 = vmatpush1.xpose.msra.mxu0 0.0
    %282 = vmatprep.subr.mxu0 0.0
    %283 = vmatpush1.xpose.msra.mxu0 0.0
    %284 = vmatprep.subr.mxu0 0.0
    %285 = vmatpush1.xpose.msra.mxu0 0.0
    %286 = vmatprep.subr.mxu0 0.0
    %287 = vmatpush1.xpose.msra.mxu0 0.0
    %288 = vmatprep.subr.mxu0 0.0
    %289 = vmatpush1.xpose.msra.mxu0 0.0
    %290 = vmatprep.subr.mxu0 0.0
    %291 = vmatpush1.xpose.msra.mxu0 0.0
    %292 = vmatprep.subr.mxu0 0.0
    %293 = vmatpush1.xpose.msra.mxu0 0.0
    %294 = vmatprep.subr.mxu0 0.0
    %295 = vmatpush1.xpose.msra.mxu0 0.0
    %296 = vmatprep.subr.mxu0 0.0
    %297 = vmatpush1.xpose.msra.mxu0 0.0
    %298 = vmatprep.subr.mxu0 0.0
    %299 = vmatpush1.xpose.msra.mxu0 0.0
    %300 = vmatprep.subr.mxu0 0.0
    %301 = vmatpush1.xpose.msra.mxu0 0.0
    %302 = vmatprep.subr.mxu0 0.0
    %303 = vmatpush1.xpose.msra.mxu0 0.0
    %304 = vmatprep.subr.mxu0 0.0
    %305 = vmatpush1.xpose.msra.mxu0 0.0
    %306 = vmatprep.subr.mxu0 0.0
    %307 = vmatpush1.xpose.msra.mxu0 0.0
    %308 = vmatprep.subr.mxu0 0.0
    %309 = vmatpush1.xpose.msra.mxu0 0.0
    %310 = vmatprep.subr.mxu0 0.0
    %311 = vmatpush1.xpose.msra.mxu0 0.0
    %312 = vmatprep.subr.mxu0 0.0
    %313 = vmatpush1.xpose.msra.mxu0 0.0
    %314 = vmatprep.subr.mxu0 0.0
    %315 = vmatpush1.xpose.msra.mxu0 0.0
    %316 = vmatprep.subr.mxu0 0.0
    %317 = vmatpush1.xpose.msra.mxu0 0.0
    %318 = vmatprep.subr.mxu0 0.0
    %319 = vmatpush1.xpose.msra.mxu0 0.0
    %320 = vmatprep.subr.mxu0 0.0
    %321 = vmatpush1.xpose.msra.mxu0 0.0
    %322 = vmatprep.subr.mxu0 0.0
    %323 = vmatpush1.xpose.msra.mxu0 0.0
    %324 = vmatprep.subr.mxu0 0.0
    %325 = vmatpush1.xpose.msra.mxu0 0.0
    %326 = vmatprep.mubr.f32.mxu0 %v241
    %327 = vmatmul.mubr.f32.gmra.mrb[0].mxu0 %v240
    %v328 = vpop.f32.mrb[0].mxu0
    %v329 = vadd.f32 0.0, %v328
    %v330 = vpop.f32.mrb[0].mxu0
    %331 = vmatprep.mubr.f32.mxu0 %v243
    %332 = vmatmul.mubr.f32.gmra.mrb[0].mxu0 %v242
    %v333 = vpop.f32.mrb[0].mxu0
    %v334 = vadd.f32 0.0, %v333
    %v335 = vpop.f32.mrb[0].mxu0
    %336 = vdwg.mxu0
    %v337 = vadd.f32 %v244, %v329
    %v338 = vadd.f32 %v245, %v334
    %339 = vst.msk [vmem:[#allocation2] sm:$0xff] %vm56, %v337
    %340 = vst.msk [vmem:[#allocation2 + $0x8] sm:$0xff] %vm56, %v338
    // Predicated region
    $region18: #{mlp_forward.1} parent=1 // pred_check
      %p341 = pneg %p15
    $region19: #{mlp_forward.1} parent=1 // pred_check_branch
      %343 = sbr.rel (%p341) target = $region21
    $region20: #{mlp_forward.1} parent=1 // pred_region
      %v344 = vld [vmem:[#allocation2] sm:$0xff]
      %v345 = vld [vmem:[#allocation2 + $0x8] sm:$0xff]
      %346 = vst.msk [vmem:[#allocation3] sm:$0xff] %vm56, %v344
      %347 = vst.msk [vmem:[#allocation3 + $0x8] sm:$0xff] %vm56, %v345
    $region21: #{mlp_forward.1} parent=1 // pred_fallthru
      _
    // Predicated region
    $region22: #{mlp_forward.1} parent=1 // pred_check
      _
    $region23: #{mlp_forward.1} parent=1 // pred_check_branch
      %349 = sbr.rel (0) target = $region25
    $region24: #{mlp_forward.1} parent=1 // pred_region
      %s351 = ssub.s32 256, 256
      %352 = vsyncadd [#allocation4], %s351
      %s353 = sshll.u32 [#allocation3], 4
      %s354 = int_to_ptr.vmem [resolvable:$true] %s353
      %359 = dma.vmem_to_hbm [thread:$0]  %s354, 256, %s3, [#allocation4], 128, 128, 8
    $region25: #{mlp_forward.1} parent=1 // pred_fallthru
      _
    // Predicated region
    $region26: #{mlp_forward.1} parent=1 // pred_check
      _
    $region27: #{mlp_forward.1} parent=1 // pred_check_branch
      %361 = sbr.rel (0) target = $region29
    $region28: #{mlp_forward.1} parent=1 // pred_region
      %362 = dma.done [#allocation4], 256
    $region29: #{mlp_forward.1} parent=1 // pred_fallthru
      _
    %363 = vsyncpa [#allocation4], 1

</llo_original>
